<compile_context>
chip_gen: v7x
topology: tpu7x:2x2x1
jax: 0.10.0
libtpu: 0.0.40
codegen_flags: <defaults>
</compile_context>

<pallas_src>
import jax
import jax.numpy as jnp
from jax.experimental import pallas as pl
from jax.experimental.pallas import tpu as pltpu


def _identity_kernel(x_ref, o_ref):
    # Whole-block load + store: the only "compute" an Identity has.
    o_ref[...] = x_ref[...]


def _sublane_multiple(dtype) -> int:
    """Dtype-aware sublane packing: 8 for 4-byte, 16 for 2-byte, 32 for 1-byte."""
    itemsize = jnp.dtype(dtype).itemsize
    if itemsize >= 4:
        return 8
    if itemsize == 2:
        return 16
    return 32


def identity_forward(x, mask=None, *, max_block_bytes=2 * 1024 * 1024):
    """Pallas implementation of Identity.forward: returns x unchanged.

    - Flattens x to a 2-D (rows, last_dim) slab (a bitcast-level reshape,
      not a copy) so the block layout is lane-dense.
    - Block = (block_rows, C) with C == full last dim (always a legal block
      shape) and block_rows a large, sublane-aligned row count capped at
      `max_block_bytes` per buffer, so 4 live buffers (in+out double
      buffering) stay well under the default scoped-VMEM limit on
      v5e (16 MiB) / v6e (32 MiB) / v7x (32 MiB of 64 MiB).
    - 1-D grid over rows, marked "parallel" so v7x's two TensorCores split it.
    - No jnp.pad / output slice: ragged last row-blocks are handled by Pallas.
    """
    del mask  # Identity ignores the mask, exactly like the PyTorch module.

    # In production code the right move is simply:  return x
    # (a kernel copy can never beat "don't copy").  We run the kernel anyway
    # because this exercise is about the Pallas implementation.

    orig_shape = x.shape
    if x.ndim == 0:
        x2 = x.reshape(1, 1)
    elif x.ndim == 1:
        x2 = x.reshape(1, -1)
    else:
        x2 = x.reshape(-1, orig_shape[-1])
    R, C = x2.shape

    itemsize = jnp.dtype(x.dtype).itemsize
    sub = _sublane_multiple(x.dtype)

    # Largest sublane-aligned row count whose block stays under the budget.
    rows_budget = max(1, max_block_bytes // max(1, C * itemsize))
    block_rows = (rows_budget // sub) * sub
    if block_rows < sub or block_rows >= R:
        # Full-extent row block: always a legal block shape, single/few steps.
        block_rows = R
    # TODO(synk): if a single row ever exceeds max_block_bytes (C huge), add a
    # column-tiling path (C % 128 == 0) instead of one full-width block.

    grid_rows = pl.cdiv(R, block_rows)

    out = pl.pallas_call(
        _identity_kernel,
        out_shape=jax.ShapeDtypeStruct((R, C), x.dtype),
        grid=(grid_rows,),
        in_specs=[pl.BlockSpec((block_rows, C), lambda i: (i, 0))],
        out_specs=pl.BlockSpec((block_rows, C), lambda i: (i, 0)),
        compiler_params=pltpu.CompilerParams(
            dimension_semantics=("parallel",),
        ),
    )(x2)

    return out.reshape(orig_shape)


if __name__ == "__main__":
    key = jax.random.PRNGKey(0)
    # Small transformer-ish shapes: batch=2, seq=8, hidden=32.
    x = jax.random.normal(key, (2, 8, 32), dtype=jnp.float32)
    mask = jnp.ones((2, 8), dtype=jnp.bool_)  # ignored, per module semantics

    y = identity_forward(x, mask)
    jax.block_until_ready(y)

    assert y.shape == x.shape and y.dtype == x.dtype
    assert bool(jnp.all(y == x))
    print("KERNEL_OK")
</pallas_src>

<mosaic_0001>
module attributes {stable_mosaic.version = 11 : i64} {
  func.func @_identity_kernel(%arg0: i32, %arg1: memref<16x32xf32, #tpu.memory_space<vmem>>, %arg2: memref<16x32xf32, #tpu.memory_space<vmem>>) attributes {dimension_semantics = [#tpu.dimension_semantics<parallel>], iteration_bounds = array<i64: 1>, scalar_prefetch = 0 : i64, scratch_operands = 0 : i64, tpu.core_type = #tpu.core_type<tc>, window_params = [{transform_indices = @transform_0, window_bounds = array<i64: 16, 32>}, {transform_indices = @transform_1, window_bounds = array<i64: 16, 32>}]} {
    %c0 = arith.constant 0 : index
    %c0_0 = arith.constant 0 : index
    %0 = vector.load %arg1[%c0, %c0_0] : memref<16x32xf32, #tpu.memory_space<vmem>>, vector<16x32xf32>
    %c0_1 = arith.constant 0 : index
    %c0_2 = arith.constant 0 : index
    %1 = vector.load %arg2[%c0_1, %c0_2] : memref<16x32xf32, #tpu.memory_space<vmem>>, vector<16x32xf32>
    tpu.vector_store %arg2[%c0_1, %c0_2], %0 {strides = array<i32>} : memref<16x32xf32, #tpu.memory_space<vmem>>, vector<16x32xf32>,
    return
  }
  func.func @transform_0(%arg0: i32) -> (i32, i32) {
    %c0_i32 = arith.constant 0 : i32
    %c0_i32_0 = arith.constant 0 : i32
    return %arg0, %c0_i32 : i32, i32
  }
  func.func @transform_1(%arg0: i32) -> (i32, i32) {
    %c0_i32 = arith.constant 0 : i32
    %c0_i32_0 = arith.constant 0 : i32
    return %arg0, %c0_i32 : i32, i32
  }
}

</mosaic_0001>

<llo_original>
// kernel: tpu_custom_call.1
$region0: #{tpu_custom_call.1}
  #allocation0 [shape = 'u32[]', space=smem, size = 0x4, offset = 0x4, fixed_abs, tag = 'smem constant byte address 0x4 - core index']
  #allocation1 [shape = 'u32[144,128]{1,0:T(1,128)}', space=vmem, size = 0x12000, scoped, tag = 'internal scratch']
  %s0 = inlined_call_operand.hbm [shape: f32[16,32], index: 0, kind: input, shape index: {}]
  %s1 = inlined_call_operand.hbm [shape: f32[16,32], index: 1, kind: output, shape index: {}]
  %s2 = sld [smem:[#allocation0]]
  $region18: #{tpu_custom_call.1} parent=0
    _
  %s4 = ssub.s32 1, %s2
  %s5 = scalar_select 0, %s4, %s2
  $region1: #{tpu_custom_call.1} parent=0
    #allocation2 [shape = 'u8[8192]{0}', space=vmem, size = 0x2000, scoped, tag = 'input window, operand 0, single buffered']
    #allocation3 [shape = 's32[1]{0}', space=sflag, size = 0x4, scoped, tag = 'scoped memory for tpu_custom_call.1']
    #allocation4 [shape = 's32[1]{0}', space=sflag, size = 0x4, scoped, tag = 'scoped memory for tpu_custom_call.1']
    #allocation5 [shape = 'u8[8192]{0}', space=vmem, size = 0x2000, scoped, tag = 'output window, operand 0, single buffered']
    %6 = vsyncpa [#allocation3], 0
    %7 = vsyncpa [#allocation4], 0
    // Predicated region
    $region2: #{tpu_custom_call.1} parent=1 // pred_check
      _
    $region3: #{tpu_custom_call.1} parent=1 // pred_check_branch
      %9 = sbr.rel (0) target = $region5
    $region4: #{tpu_custom_call.1} parent=1 // pred_region
      %s11 = ssub.s32 256, 256
      %12 = vsyncadd [#allocation3], %s11
      %s13 = sshll.u32 [#allocation2], 4
      %s14 = int_to_ptr.vmem [resolvable:$true] %s13
      %19 = dma.hbm_to_vmem [thread:$0]  %s0, 256, %s14, [#allocation3], 128, 128, 8
    $region5: #{tpu_custom_call.1} parent=1 // pred_fallthru
      _
    // Predicated region
    $region6: #{tpu_custom_call.1} parent=1 // pred_check
      _
    $region7: #{tpu_custom_call.1} parent=1 // pred_check_branch
      %21 = sbr.rel (0) target = $region9
    $region8: #{tpu_custom_call.1} parent=1 // pred_region
      %22 = dma.done [#allocation3], 256
    $region9: #{tpu_custom_call.1} parent=1 // pred_fallthru
      _
    %v23 = vld [vmem:[#allocation2] sm:$0xff]
    %v24 = vld [vmem:[#allocation2 + $0x8] sm:$0xff]
    %vm25 = vcmask 261120
    %26 = vst.msk [vmem:[#allocation5] sm:$0xff] %vm25, %v23
    %27 = vst.msk [vmem:[#allocation5 + $0x8] sm:$0xff] %vm25, %v24
    // Predicated region
    $region10: #{tpu_custom_call.1} parent=1 // pred_check
      _
    $region11: #{tpu_custom_call.1} parent=1 // pred_check_branch
      %29 = sbr.rel (0) target = $region13
    $region12: #{tpu_custom_call.1} parent=1 // pred_region
      %s31 = ssub.s32 256, 256
      %32 = vsyncadd [#allocation4], %s31
      %s33 = sshll.u32 [#allocation5], 4
      %s34 = int_to_ptr.vmem [resolvable:$true] %s33
      %39 = dma.vmem_to_hbm [thread:$0]  %s34, 256, %s1, [#allocation4], 128, 128, 8
    $region13: #{tpu_custom_call.1} parent=1 // pred_fallthru
      _
    // Predicated region
    $region14: #{tpu_custom_call.1} parent=1 // pred_check
      _
    $region15: #{tpu_custom_call.1} parent=1 // pred_check_branch
      %41 = sbr.rel (0) target = $region17
    $region16: #{tpu_custom_call.1} parent=1 // pred_region
      %42 = dma.done [#allocation4], 256
    $region17: #{tpu_custom_call.1} parent=1 // pred_fallthru
      _
    %43 = vsyncpa [#allocation3], 1
    %44 = vsyncpa [#allocation4], 1

</llo_original>
